<compile_context>
chip_gen: v7x
topology: tpu7x:2x2x1
jax: 0.10.0
libtpu: 0.0.40
codegen_flags: <defaults>
</compile_context>

<pallas_src>
import jax
import jax.numpy as jnp
from jax import lax
from jax.experimental import pallas as pl
from jax.experimental.pallas import tpu as pltpu


def _round_up(x, m):
    return (x + m - 1) // m * m


def _default_batch_tile():
    # v5e-class MXU is 4x128^2 -> M=128 is native; v6e/v7x are 2x256^2 -> M=256.
    try:
        kind = jax.devices()[0].device_kind.lower()
    except Exception:
        return 128
    if any(v in kind for v in ("v2", "v3", "v4", "v5")):
        return 128
    return 256


def mynetwork_kernel(ids_ref,               # VMEM (TB, S)    int32 token ids
                     emb_ref,               # VMEM (V_pad, E) bf16 embedding table
                     w_in_ref, b_in_ref,    # VMEM (E, H) bf16, (1, H) f32
                     w_h_ref, b_h_ref,      # VMEM (H, H) bf16, (1, H) f32
                     w_out_ref, b_out_ref,  # VMEM (H, OP) bf16, (1, OP) f32
                     o_ref):                # VMEM (TB, OP) f32 output block
    TB, S = ids_ref.shape
    V_pad = emb_ref.shape[0]

    # ---- embedding gather + sum-pool as a counts @ table matmul --------------
    # counts[b, v] = #positions s with ids[b, s] == v  (out-of-range ids match
    # nothing / zero-padded rows, so they contribute zero to the pool).
    ids = ids_ref[...]                                               # (TB, S)
    v_iota = lax.broadcasted_iota(jnp.int32, (TB, V_pad), 1)         # (TB, V_pad)

    counts = jnp.zeros((TB, V_pad), jnp.float32)
    for s in range(S):  # S is static; each step is one vectorized VPU cmp+add
        counts = counts + (ids[:, s:s + 1] == v_iota).astype(jnp.float32)
    # TODO(synk): for very large S, switch to lax.fori_loop with partial unroll.

    # pooled = sum_s emb[ids[:, s]]  (the 1/S of torch.mean is folded into w_in)
    pooled = jnp.dot(counts.astype(jnp.bfloat16), emb_ref[...],
                     preferred_element_type=jnp.float32)             # (TB, E)

    # ---- MLP: Linear -> ReLU -> (Linear -> ReLU) -> Linear --------------------
    # bf16 operands on the MXU, f32 accumulation; bias-add / ReLU in f32.
    h = jnp.dot(pooled.astype(jnp.bfloat16), w_in_ref[...],
                preferred_element_type=jnp.float32)
    h = jnp.maximum(h + b_in_ref[...], 0.0)

    h = jnp.dot(h.astype(jnp.bfloat16), w_h_ref[...],
                preferred_element_type=jnp.float32)
    h = jnp.maximum(h + b_h_ref[...], 0.0)

    out = jnp.dot(h.astype(jnp.bfloat16), w_out_ref[...],
                  preferred_element_type=jnp.float32)
    o_ref[...] = (out + b_out_ref[...]).astype(o_ref.dtype)


def mynetwork_forward(token_ids, params, *, batch_tile=None):
    """token_ids: (B, S) int32. params: dict from init_params (weights as (in, out))."""
    B, S = token_ids.shape
    V, E = params["embedding"].shape
    H = params["w_in"].shape[1]
    O = params["w_out"].shape[1]

    if batch_tile is None:
        batch_tile = _default_batch_tile()

    # ---- parameter prep --------------------------------------------------------
    V_pad = _round_up(V, 128)          # lane-dense vocab dim for counts @ table
    OP = _round_up(O, 128)             # lane-dense output features (unmasked vst)

    emb = jnp.zeros((V_pad, E), jnp.float32).at[:V].set(params["embedding"])
    emb = emb.astype(jnp.bfloat16)

    w_in = (params["w_in"] * (1.0 / S)).astype(jnp.bfloat16)   # fold mean's 1/S
    b_in = params["b_in"].astype(jnp.float32)
    w_h = params["w_h"].astype(jnp.bfloat16)
    b_h = params["b_h"].astype(jnp.float32)
    w_out = jnp.zeros((H, OP), jnp.float32).at[:, :O].set(params["w_out"])
    w_out = w_out.astype(jnp.bfloat16)
    b_out = jnp.zeros((1, OP), jnp.float32).at[:, :O].set(params["b_out"])

    # ---- batch tiling (padded rows use token 0; their outputs are discarded) ---
    TB = min(batch_tile, _round_up(B, 8))
    B_pad = _round_up(B, TB)
    ids = jnp.zeros((B_pad, S), jnp.int32).at[:B].set(token_ids.astype(jnp.int32))

    rep = lambda i: (0, 0)   # grid-invariant (resident) table / weight blocks

    # VMEM budget: resident table + weights (double-buffered by default) plus
    # per-step id/output tiles and live intermediates, with headroom.
    resident = (V_pad * E + E * H + H * H + H * OP) * 2 + (2 * H + OP) * 4
    per_step = TB * S * 4 + TB * OP * 4
    live = (TB * V_pad + TB * E + 2 * TB * H + TB * OP) * 4
    vmem_limit = min(64 << 20,                       # v7x per-TensorCore VMEM
                     max(int((2 * (resident + per_step) + live) * 1.5), 16 << 20))

    out_padded = pl.pallas_call(
        mynetwork_kernel,
        out_shape=jax.ShapeDtypeStruct((B_pad, OP), jnp.float32),
        grid_spec=pltpu.PrefetchScalarGridSpec(
            num_scalar_prefetch=0,
            grid=(B_pad // TB,),
            in_specs=[
                pl.BlockSpec((TB, S), lambda i: (i, 0)),    # token ids (VMEM)
                pl.BlockSpec((V_pad, E), rep),              # embedding table (bf16)
                pl.BlockSpec((E, H), rep),                  # w_in (1/S folded in)
                pl.BlockSpec((1, H), rep),                  # b_in
                pl.BlockSpec((H, H), rep),                  # w_h
                pl.BlockSpec((1, H), rep),                  # b_h
                pl.BlockSpec((H, OP), rep),                 # w_out (lane-padded)
                pl.BlockSpec((1, OP), rep),                 # b_out (lane-padded)
            ],
            out_specs=pl.BlockSpec((TB, OP), lambda i: (i, 0)),
        ),
        compiler_params=pltpu.CompilerParams(
            # Batch blocks are independent -> shard across v7x's 2 TensorCores.
            dimension_semantics=("parallel",),
            vmem_limit_bytes=vmem_limit,
        ),
    )(ids, emb, w_in, b_in, w_h, b_h, w_out, b_out)

    return out_padded[:B, :O]


def init_params(key, vocab_size, embedding_dim, hidden_dim, output_dim):
    """Deterministic parameter init; Linear weights stored as (in, out)."""
    ks = jax.random.split(key, 7)
    scale = 0.02
    return {
        "embedding": scale * jax.random.normal(ks[0], (vocab_size, embedding_dim), jnp.float32),
        "w_in":  scale * jax.random.normal(ks[1], (embedding_dim, hidden_dim), jnp.float32),
        "b_in":  scale * jax.random.normal(ks[2], (1, hidden_dim), jnp.float32),
        "w_h":   scale * jax.random.normal(ks[3], (hidden_dim, hidden_dim), jnp.float32),
        "b_h":   scale * jax.random.normal(ks[4], (1, hidden_dim), jnp.float32),
        "w_out": scale * jax.random.normal(ks[5], (hidden_dim, output_dim), jnp.float32),
        "b_out": scale * jax.random.normal(ks[6], (1, output_dim), jnp.float32),
    }


def _ref_forward(token_ids, params):
    """Pure-JAX reference mirroring the kernel numerics (bf16 table/weights, f32 acc)."""
    S = token_ids.shape[1]
    emb_q = params["embedding"].astype(jnp.bfloat16).astype(jnp.float32)
    pooled = jnp.sum(jnp.take(emb_q, token_ids, axis=0), axis=1)   # 1/S folded into w_in

    def dense(a, w, b, scale=1.0):
        wq = (w * scale).astype(jnp.bfloat16).astype(jnp.float32)
        aq = a.astype(jnp.bfloat16).astype(jnp.float32)
        return jnp.dot(aq, wq, preferred_element_type=jnp.float32) + b

    h = jnp.maximum(dense(pooled, params["w_in"], params["b_in"], scale=1.0 / S), 0.0)
    h = jnp.maximum(dense(h, params["w_h"], params["b_h"]), 0.0)
    return dense(h, params["w_out"], params["b_out"])


if __name__ == "__main__":
    # Small shapes consistent with the module: batch=2, seq=8, vocab=100,
    # embedding_dim=32, hidden_dim=32, output_dim=8, n_hidden_layers=1.
    key = jax.random.PRNGKey(0)
    k_tok, k_params = jax.random.split(key)

    vocab_size, embedding_dim, hidden_dim, output_dim = 100, 32, 32, 8
    B, S = 2, 8

    token_ids = jax.random.randint(k_tok, (B, S), 0, vocab_size, dtype=jnp.int32)
    params = init_params(k_params, vocab_size, embedding_dim, hidden_dim, output_dim)

    out = mynetwork_forward(token_ids, params)
    jax.block_until_ready(out)

    ref = _ref_forward(token_ids, params)
    assert out.shape == (B, output_dim)
    assert jnp.allclose(out, ref, atol=2e-3, rtol=1e-2), (
        f"max abs diff = {float(jnp.max(jnp.abs(out - ref)))}")

    print("KERNEL_OK")
</pallas_src>

<mosaic_0001>
module attributes {stable_mosaic.version = 11 : i64} {
  func.func @mynetwork_kernel(%arg0: i32, %arg1: memref<8x8xi32, #tpu.memory_space<vmem>>, %arg2: memref<128x32xbf16, #tpu.memory_space<vmem>>, %arg3: memref<32x32xbf16, #tpu.memory_space<vmem>>, %arg4: memref<1x32xf32, #tpu.memory_space<vmem>>, %arg5: memref<32x32xbf16, #tpu.memory_space<vmem>>, %arg6: memref<1x32xf32, #tpu.memory_space<vmem>>, %arg7: memref<32x128xbf16, #tpu.memory_space<vmem>>, %arg8: memref<1x128xf32, #tpu.memory_space<vmem>>, %arg9: memref<8x128xf32, #tpu.memory_space<vmem>>) attributes {dimension_semantics = [#tpu.dimension_semantics<parallel>], iteration_bounds = array<i64: 1>, scalar_prefetch = 0 : i64, scratch_operands = 0 : i64, tpu.core_type = #tpu.core_type<tc>, window_params = [{transform_indices = @transform_0, window_bounds = array<i64: 8, 8>}, {pipeline_mode = #tpu.pipeline_mode<synchronous>, transform_indices = @transform_1, window_bounds = array<i64: 128, 32>}, {pipeline_mode = #tpu.pipeline_mode<synchronous>, transform_indices = @transform_2, window_bounds = array<i64: 32, 32>}, {pipeline_mode = #tpu.pipeline_mode<synchronous>, transform_indices = @transform_3, window_bounds = array<i64: 1, 32>}, {pipeline_mode = #tpu.pipeline_mode<synchronous>, transform_indices = @transform_4, window_bounds = array<i64: 32, 32>}, {pipeline_mode = #tpu.pipeline_mode<synchronous>, transform_indices = @transform_5, window_bounds = array<i64: 1, 32>}, {pipeline_mode = #tpu.pipeline_mode<synchronous>, transform_indices = @transform_6, window_bounds = array<i64: 32, 128>}, {pipeline_mode = #tpu.pipeline_mode<synchronous>, transform_indices = @transform_7, window_bounds = array<i64: 1, 128>}, {transform_indices = @transform_8, window_bounds = array<i64: 8, 128>}]} {
    %c0 = arith.constant 0 : index
    %c0_0 = arith.constant 0 : index
    %0 = vector.load %arg1[%c0, %c0_0] : memref<8x8xi32, #tpu.memory_space<vmem>>, vector<8x8xi32>
    %1 = tpu.iota {dimensions = array<i32: 1>} : vector<8x128xi32>
    %cst = arith.constant 0.000000e+00 : f32
    %2 = vector.broadcast %cst : f32 to vector<8x128xf32>
    %3 = vector.extract_strided_slice %0 {offsets = [0, 0], sizes = [8, 1], strides = [1, 1]} : vector<8x8xi32> to vector<8x1xi32>
    %4 = vector.broadcast %3 : vector<8x1xi32> to vector<8x128xi32>
    %5 = arith.cmpi eq, %4, %1 : vector<8x128xi32>
    %6 = arith.extui %5 : vector<8x128xi1> to vector<8x128xi32>
    %7 = arith.sitofp %6 : vector<8x128xi32> to vector<8x128xf32>
    %8 = arith.addf %2, %7 : vector<8x128xf32>
    %9 = vector.extract_strided_slice %0 {offsets = [0, 1], sizes = [8, 1], strides = [1, 1]} : vector<8x8xi32> to vector<8x1xi32>
    %10 = vector.broadcast %9 : vector<8x1xi32> to vector<8x128xi32>
    %11 = arith.cmpi eq, %10, %1 : vector<8x128xi32>
    %12 = arith.extui %11 : vector<8x128xi1> to vector<8x128xi32>
    %13 = arith.sitofp %12 : vector<8x128xi32> to vector<8x128xf32>
    %14 = arith.addf %8, %13 : vector<8x128xf32>
    %15 = vector.extract_strided_slice %0 {offsets = [0, 2], sizes = [8, 1], strides = [1, 1]} : vector<8x8xi32> to vector<8x1xi32>
    %16 = vector.broadcast %15 : vector<8x1xi32> to vector<8x128xi32>
    %17 = arith.cmpi eq, %16, %1 : vector<8x128xi32>
    %18 = arith.extui %17 : vector<8x128xi1> to vector<8x128xi32>
    %19 = arith.sitofp %18 : vector<8x128xi32> to vector<8x128xf32>
    %20 = arith.addf %14, %19 : vector<8x128xf32>
    %21 = vector.extract_strided_slice %0 {offsets = [0, 3], sizes = [8, 1], strides = [1, 1]} : vector<8x8xi32> to vector<8x1xi32>
    %22 = vector.broadcast %21 : vector<8x1xi32> to vector<8x128xi32>
    %23 = arith.cmpi eq, %22, %1 : vector<8x128xi32>
    %24 = arith.extui %23 : vector<8x128xi1> to vector<8x128xi32>
    %25 = arith.sitofp %24 : vector<8x128xi32> to vector<8x128xf32>
    %26 = arith.addf %20, %25 : vector<8x128xf32>
    %27 = vector.extract_strided_slice %0 {offsets = [0, 4], sizes = [8, 1], strides = [1, 1]} : vector<8x8xi32> to vector<8x1xi32>
    %28 = vector.broadcast %27 : vector<8x1xi32> to vector<8x128xi32>
    %29 = arith.cmpi eq, %28, %1 : vector<8x128xi32>
    %30 = arith.extui %29 : vector<8x128xi1> to vector<8x128xi32>
    %31 = arith.sitofp %30 : vector<8x128xi32> to vector<8x128xf32>
    %32 = arith.addf %26, %31 : vector<8x128xf32>
    %33 = vector.extract_strided_slice %0 {offsets = [0, 5], sizes = [8, 1], strides = [1, 1]} : vector<8x8xi32> to vector<8x1xi32>
    %34 = vector.broadcast %33 : vector<8x1xi32> to vector<8x128xi32>
    %35 = arith.cmpi eq, %34, %1 : vector<8x128xi32>
    %36 = arith.extui %35 : vector<8x128xi1> to vector<8x128xi32>
    %37 = arith.sitofp %36 : vector<8x128xi32> to vector<8x128xf32>
    %38 = arith.addf %32, %37 : vector<8x128xf32>
    %39 = vector.extract_strided_slice %0 {offsets = [0, 6], sizes = [8, 1], strides = [1, 1]} : vector<8x8xi32> to vector<8x1xi32>
    %40 = vector.broadcast %39 : vector<8x1xi32> to vector<8x128xi32>
    %41 = arith.cmpi eq, %40, %1 : vector<8x128xi32>
    %42 = arith.extui %41 : vector<8x128xi1> to vector<8x128xi32>
    %43 = arith.sitofp %42 : vector<8x128xi32> to vector<8x128xf32>
    %44 = arith.addf %38, %43 : vector<8x128xf32>
    %45 = vector.extract_strided_slice %0 {offsets = [0, 7], sizes = [8, 1], strides = [1, 1]} : vector<8x8xi32> to vector<8x1xi32>
    %46 = vector.broadcast %45 : vector<8x1xi32> to vector<8x128xi32>
    %47 = arith.cmpi eq, %46, %1 : vector<8x128xi32>
    %48 = arith.extui %47 : vector<8x128xi1> to vector<8x128xi32>
    %49 = arith.sitofp %48 : vector<8x128xi32> to vector<8x128xf32>
    %50 = arith.addf %44, %49 : vector<8x128xf32>
    %51 = arith.truncf %50 : vector<8x128xf32> to vector<8x128xbf16>
    %c0_1 = arith.constant 0 : index
    %c0_2 = arith.constant 0 : index
    %52 = vector.load %arg2[%c0_1, %c0_2] : memref<128x32xbf16, #tpu.memory_space<vmem>>, vector<128x32xbf16>
    %cst_3 = arith.constant dense<0.000000e+00> : vector<8x32xf32>
    %53 = tpu.matmul %51, %52, %cst_3 {dimension_numbers = #tpu.dot_dimension_numbers<[1], [0], [0], [1], [0, 0, 1, 1], [], []>} : vector<8x128xbf16>, vector<128x32xbf16>, vector<8x32xf32> -> vector<8x32xf32>
    %54 = arith.truncf %53 : vector<8x32xf32> to vector<8x32xbf16>
    %c0_4 = arith.constant 0 : index
    %c0_5 = arith.constant 0 : index
    %55 = vector.load %arg3[%c0_4, %c0_5] : memref<32x32xbf16, #tpu.memory_space<vmem>>, vector<32x32xbf16>
    %cst_6 = arith.constant dense<0.000000e+00> : vector<8x32xf32>
    %56 = tpu.matmul %54, %55, %cst_6 {dimension_numbers = #tpu.dot_dimension_numbers<[1], [0], [0], [1], [0, 0, 1, 1], [], []>} : vector<8x32xbf16>, vector<32x32xbf16>, vector<8x32xf32> -> vector<8x32xf32>
    %c0_7 = arith.constant 0 : index
    %c0_8 = arith.constant 0 : index
    %57 = vector.load %arg4[%c0_7, %c0_8] : memref<1x32xf32, #tpu.memory_space<vmem>>, vector<1x32xf32>
    %58 = vector.broadcast %57 : vector<1x32xf32> to vector<8x32xf32>
    %59 = arith.addf %56, %58 : vector<8x32xf32>
    %cst_9 = arith.constant 0.000000e+00 : f32
    %60 = vector.broadcast %cst_9 : f32 to vector<8x32xf32>
    %61 = arith.maximumf %59, %60 : vector<8x32xf32>
    %62 = arith.truncf %61 : vector<8x32xf32> to vector<8x32xbf16>
    %c0_10 = arith.constant 0 : index
    %c0_11 = arith.constant 0 : index
    %63 = vector.load %arg5[%c0_10, %c0_11] : memref<32x32xbf16, #tpu.memory_space<vmem>>, vector<32x32xbf16>
    %cst_12 = arith.constant dense<0.000000e+00> : vector<8x32xf32>
    %64 = tpu.matmul %62, %63, %cst_12 {dimension_numbers = #tpu.dot_dimension_numbers<[1], [0], [0], [1], [0, 0, 1, 1], [], []>} : vector<8x32xbf16>, vector<32x32xbf16>, vector<8x32xf32> -> vector<8x32xf32>
    %c0_13 = arith.constant 0 : index
    %c0_14 = arith.constant 0 : index
    %65 = vector.load %arg6[%c0_13, %c0_14] : memref<1x32xf32, #tpu.memory_space<vmem>>, vector<1x32xf32>
    %66 = vector.broadcast %65 : vector<1x32xf32> to vector<8x32xf32>
    %67 = arith.addf %64, %66 : vector<8x32xf32>
    %cst_15 = arith.constant 0.000000e+00 : f32
    %68 = vector.broadcast %cst_15 : f32 to vector<8x32xf32>
    %69 = arith.maximumf %67, %68 : vector<8x32xf32>
    %70 = arith.truncf %69 : vector<8x32xf32> to vector<8x32xbf16>
    %c0_16 = arith.constant 0 : index
    %c0_17 = arith.constant 0 : index
    %71 = vector.load %arg7[%c0_16, %c0_17] : memref<32x128xbf16, #tpu.memory_space<vmem>>, vector<32x128xbf16>
    %cst_18 = arith.constant dense<0.000000e+00> : vector<8x128xf32>
    %72 = tpu.matmul %70, %71, %cst_18 {dimension_numbers = #tpu.dot_dimension_numbers<[1], [0], [0], [1], [0, 0, 1, 1], [], []>} : vector<8x32xbf16>, vector<32x128xbf16>, vector<8x128xf32> -> vector<8x128xf32>
    %c0_19 = arith.constant 0 : index
    %c0_20 = arith.constant 0 : index
    %73 = vector.load %arg8[%c0_19, %c0_20] : memref<1x128xf32, #tpu.memory_space<vmem>>, vector<1x128xf32>
    %74 = vector.broadcast %73 : vector<1x128xf32> to vector<8x128xf32>
    %75 = arith.addf %72, %74 : vector<8x128xf32>
    %c0_21 = arith.constant 0 : index
    %c0_22 = arith.constant 0 : index
    %76 = vector.load %arg9[%c0_21, %c0_22] : memref<8x128xf32, #tpu.memory_space<vmem>>, vector<8x128xf32>
    tpu.vector_store %arg9[%c0_21, %c0_22], %75 {strides = array<i32>} : memref<8x128xf32, #tpu.memory_space<vmem>>, vector<8x128xf32>,
    return
  }
  func.func @transform_0(%arg0: i32) -> (i32, i32) {
    %c0_i32 = arith.constant 0 : i32
    %c0_i32_0 = arith.constant 0 : i32
    return %arg0, %c0_i32 : i32, i32
  }
  func.func @transform_1(%arg0: i32) -> (i32, i32) {
    %c0_i32 = arith.constant 0 : i32
    %c0_i32_0 = arith.constant 0 : i32
    %c0_i32_1 = arith.constant 0 : i32
    return %c0_i32, %c0_i32_0 : i32, i32
  }
  func.func @transform_2(%arg0: i32) -> (i32, i32) {
    %c0_i32 = arith.constant 0 : i32
    %c0_i32_0 = arith.constant 0 : i32
    %c0_i32_1 = arith.constant 0 : i32
    return %c0_i32, %c0_i32_0 : i32, i32
  }
  func.func @transform_3(%arg0: i32) -> (i32, i32) {
    %c0_i32 = arith.constant 0 : i32
    %c0_i32_0 = arith.constant 0 : i32
    %c0_i32_1 = arith.constant 0 : i32
    return %c0_i32, %c0_i32_0 : i32, i32
  }
  func.func @transform_4(%arg0: i32) -> (i32, i32) {
    %c0_i32 = arith.constant 0 : i32
    %c0_i32_0 = arith.constant 0 : i32
    %c0_i32_1 = arith.constant 0 : i32
    return %c0_i32, %c0_i32_0 : i32, i32
  }
  func.func @transform_5(%arg0: i32) -> (i32, i32) {
    %c0_i32 = arith.constant 0 : i32
    %c0_i32_0 = arith.constant 0 : i32
    %c0_i32_1 = arith.constant 0 : i32
    return %c0_i32, %c0_i32_0 : i32, i32
  }
  func.func @transform_6(%arg0: i32) -> (i32, i32) {
    %c0_i32 = arith.constant 0 : i32
    %c0_i32_0 = arith.constant 0 : i32
    %c0_i32_1 = arith.constant 0 : i32
    return %c0_i32, %c0_i32_0 : i32, i32
  }
  func.func @transform_7(%arg0: i32) -> (i32, i32) {
    %c0_i32 = arith.constant 0 : i32
    %c0_i32_0 = arith.constant 0 : i32
    %c0_i32_1 = arith.constant 0 : i32
    return %c0_i32, %c0_i32_0 : i32, i32
  }
  func.func @transform_8(%arg0: i32) -> (i32, i32) {
    %c0_i32 = arith.constant 0 : i32
    %c0_i32_0 = arith.constant 0 : i32
    return %arg0, %c0_i32 : i32, i32
  }
}

</mosaic_0001>

<llo_original>
// kernel: tpu_custom_call.1
$region0: #{tpu_custom_call.1}
  #allocation0 [shape = 'u32[]', space=smem, size = 0x4, offset = 0x4, fixed_abs, tag = 'smem constant byte address 0x4 - core index']
  #allocation1 [shape = 'u32[144,128]{1,0:T(1,128)}', space=vmem, size = 0x12000, scoped, tag = 'internal scratch']
  %s0 = inlined_call_operand.vmem [shape: s32[8,8], index: 0, kind: input, shape index: {}]
  %s1 = inlined_call_operand.vmem [shape: bf16[128,32], index: 1, kind: input, shape index: {}]
  %s2 = inlined_call_operand.vmem [shape: bf16[32,32], index: 2, kind: input, shape index: {}]
  %s3 = inlined_call_operand.vmem [shape: f32[1,32], index: 3, kind: input, shape index: {}]
  %s4 = inlined_call_operand.vmem [shape: bf16[32,32], index: 4, kind: input, shape index: {}]
  %s5 = inlined_call_operand.vmem [shape: f32[1,32], index: 5, kind: input, shape index: {}]
  %s6 = inlined_call_operand.vmem [shape: bf16[32,128], index: 6, kind: input, shape index: {}]
  %s7 = inlined_call_operand.vmem [shape: f32[1,128], index: 7, kind: input, shape index: {}]
  %s8 = inlined_call_operand.hbm [shape: f32[8,128], index: 8, kind: output, shape index: {}]
  %s9 = sld [smem:[#allocation0]]
  $region42: #{tpu_custom_call.1} parent=0
    _
  %s11 = ssub.s32 1, %s9
  %s12 = scalar_select 0, %s11, %s9
  $region1: #{tpu_custom_call.1} parent=0
    #allocation2 [shape = 'u8[4096]{0}', space=vmem, size = 0x1000, scoped, tag = 'output window, operand 0, single buffered']
    #allocation3 [shape = 's32[1]{0}', space=sflag, size = 0x4, scoped, tag = 'scoped memory for tpu_custom_call.1']
    %13 = vsyncpa [#allocation3], 0
    // Predicated region
    $region2: #{tpu_custom_call.1} parent=1 // pred_check
      _
    $region3: #{tpu_custom_call.1} parent=1 // pred_check_branch
      %15 = sbr.rel (0) target = $region5
    $region4: #{tpu_custom_call.1} parent=1 // pred_region
      _
    $region5: #{tpu_custom_call.1} parent=1 // pred_fallthru
      _
    // Predicated region
    $region6: #{tpu_custom_call.1} parent=1 // pred_check
      _
    $region7: #{tpu_custom_call.1} parent=1 // pred_check_branch
      %17 = sbr.rel (0) target = $region9
    $region8: #{tpu_custom_call.1} parent=1 // pred_region
      _
    $region9: #{tpu_custom_call.1} parent=1 // pred_fallthru
      _
    // Predicated region
    $region10: #{tpu_custom_call.1} parent=1 // pred_check
      _
    $region11: #{tpu_custom_call.1} parent=1 // pred_check_branch
      %19 = sbr.rel (0) target = $region13
    $region12: #{tpu_custom_call.1} parent=1 // pred_region
      _
    $region13: #{tpu_custom_call.1} parent=1 // pred_fallthru
      _
    // Predicated region
    $region14: #{tpu_custom_call.1} parent=1 // pred_check
      _
    $region15: #{tpu_custom_call.1} parent=1 // pred_check_branch
      %21 = sbr.rel (0) target = $region17
    $region16: #{tpu_custom_call.1} parent=1 // pred_region
      _
    $region17: #{tpu_custom_call.1} parent=1 // pred_fallthru
      _
    // Predicated region
    $region18: #{tpu_custom_call.1} parent=1 // pred_check
      _
    $region19: #{tpu_custom_call.1} parent=1 // pred_check_branch
      %23 = sbr.rel (0) target = $region21
    $region20: #{tpu_custom_call.1} parent=1 // pred_region
      _
    $region21: #{tpu_custom_call.1} parent=1 // pred_fallthru
      _
    // Predicated region
    $region22: #{tpu_custom_call.1} parent=1 // pred_check
      _
    $region23: #{tpu_custom_call.1} parent=1 // pred_check_branch
      %25 = sbr.rel (0) target = $region25
    $region24: #{tpu_custom_call.1} parent=1 // pred_region
      _
    $region25: #{tpu_custom_call.1} parent=1 // pred_fallthru
      _
    // Predicated region
    $region26: #{tpu_custom_call.1} parent=1 // pred_check
      _
    $region27: #{tpu_custom_call.1} parent=1 // pred_check_branch
      %27 = sbr.rel (0) target = $region29
    $region28: #{tpu_custom_call.1} parent=1 // pred_region
      _
    $region29: #{tpu_custom_call.1} parent=1 // pred_fallthru
      _
    // Predicated region
    $region30: #{tpu_custom_call.1} parent=1 // pred_check
      _
    $region31: #{tpu_custom_call.1} parent=1 // pred_check_branch
      %29 = sbr.rel (0) target = $region33
    $region32: #{tpu_custom_call.1} parent=1 // pred_region
      _
    $region33: #{tpu_custom_call.1} parent=1 // pred_fallthru
      _
    %v31 = vld [vmem:[%s0] sm:$0xff]
    %v32 = vlaneseq
    %v33 = vand.u32 %v32, 127
    %34 = vset.pattern.permute.xlu0 0
    %35 = vperm.xlu0 %34, %v31
    %v36 = vpop.permute.xlu0 %35
    %vm37 = vcmp.eq.s32.totalorder %v36, %v33
    %v38 = vsel %vm37, 1, 0
    %v39 = vcvt.s32.f32 %v38
    %v40 = vadd.f32 %v39, 0.0
    %41 = vset.pattern.permute.xlu0 1
    %42 = vperm.xlu0 %41, %v31
    %v43 = vpop.permute.xlu0 %42
    %vm44 = vcmp.eq.s32.totalorder %v43, %v33
    %v45 = vsel %vm44, 1, 0
    %v46 = vcvt.s32.f32 %v45
    %v47 = vadd.f32 %v40, %v46
    %48 = vset.pattern.permute.xlu0 2
    %49 = vperm.xlu0 %48, %v31
    %v50 = vpop.permute.xlu0 %49
    %vm51 = vcmp.eq.s32.totalorder %v50, %v33
    %v52 = vsel %vm51, 1, 0
    %v53 = vcvt.s32.f32 %v52
    %v54 = vadd.f32 %v47, %v53
    %55 = vset.pattern.permute.xlu0 3
    %56 = vperm.xlu0 %55, %v31
    %v57 = vpop.permute.xlu0 %56
    %vm58 = vcmp.eq.s32.totalorder %v57, %v33
    %v59 = vsel %vm58, 1, 0
    %v60 = vcvt.s32.f32 %v59
    %v61 = vadd.f32 %v54, %v60
    %62 = vset.pattern.permute.xlu0 4
    %63 = vperm.xlu0 %62, %v31
    %v64 = vpop.permute.xlu0 %63
    %vm65 = vcmp.eq.s32.totalorder %v64, %v33
    %v66 = vsel %vm65, 1, 0
    %v67 = vcvt.s32.f32 %v66
    %v68 = vadd.f32 %v61, %v67
    %69 = vset.pattern.permute.xlu0 5
    %70 = vperm.xlu0 %69, %v31
    %v71 = vpop.permute.xlu0 %70
    %vm72 = vcmp.eq.s32.totalorder %v71, %v33
    %v73 = vsel %vm72, 1, 0
    %v74 = vcvt.s32.f32 %v73
    %v75 = vadd.f32 %v68, %v74
    %76 = vset.pattern.permute.xlu0 6
    %77 = vperm.xlu0 %76, %v31
    %v78 = vpop.permute.xlu0 %77
    %vm79 = vcmp.eq.s32.totalorder %v78, %v33
    %v80 = vsel %vm79, 1, 0
    %v81 = vcvt.s32.f32 %v80
    %v82 = vadd.f32 %v75, %v81
    %83 = vset.pattern.permute.xlu0 7
    %84 = vperm.xlu0 %83, %v31
    %v85 = vpop.permute.xlu0 %84
    %vm86 = vcmp.eq.s32.totalorder %v85, %v33
    %v87 = vsel %vm86, 1, 0
    %v88 = vcvt.s32.f32 %v87
    %v89 = vadd.f32 %v82, %v88
    %v90 = vpack.c.bf16 %v89, %v89
    %v91 = vld [vmem:[%s1] sm:$0xf]
    %v92 = vld [vmem:[%s1 + $0x4] sm:$0xf]
    %v93 = vld [vmem:[%s1 + $0x8] sm:$0xf]
    %v94 = vld [vmem:[%s1 + $0xc] sm:$0xf]
    %v95 = vld [vmem:[%s1 + $0x10] sm:$0xf]
    %v96 = vld [vmem:[%s1 + $0x14] sm:$0xf]
    %v97 = vld [vmem:[%s1 + $0x18] sm:$0xf]
    %v98 = vld [vmem:[%s1 + $0x1c] sm:$0xf]
    %v99 = vld [vmem:[%s1 + $0x20] sm:$0xf]
    %v100 = vld [vmem:[%s1 + $0x24] sm:$0xf]
    %v101 = vld [vmem:[%s1 + $0x28] sm:$0xf]
    %v102 = vld [vmem:[%s1 + $0x2c] sm:$0xf]
    %v103 = vld [vmem:[%s1 + $0x30] sm:$0xf]
    %v104 = vld [vmem:[%s1 + $0x34] sm:$0xf]
    %v105 = vld [vmem:[%s1 + $0x38] sm:$0xf]
    %v106 = vld [vmem:[%s1 + $0x3c] sm:$0xf]
    %v123 = vunpack.c.l.b16 %v91
    %v124 = vunpack.c.l.b16 %v92
    %v125 = vunpack.c.l.b16 %v93
    %v126 = vunpack.c.l.b16 %v94
    %v127 = vunpack.c.l.b16 %v95
    %v128 = vunpack.c.l.b16 %v96
    %v129 = vunpack.c.l.b16 %v97
    %v130 = vunpack.c.l.b16 %v98
    %v131 = vunpack.c.l.b16 %v99
    %v132 = vunpack.c.l.b16 %v100
    %v133 = vunpack.c.l.b16 %v101
    %v134 = vunpack.c.l.b16 %v102
    %v135 = vunpack.c.l.b16 %v103
    %v136 = vunpack.c.l.b16 %v104
    %v137 = vunpack.c.l.b16 %v105
    %v138 = vunpack.c.l.b16 %v106
    %v139 = vpack.c.b16 %v124, %v123
    %v140 = vpack.c.b16 %v126, %v125
    %v141 = vpack.c.b16 %v128, %v127
    %v142 = vpack.c.b16 %v130, %v129
    %v143 = vpack.c.b16 %v132, %v131
    %v144 = vpack.c.b16 %v134, %v133
    %v145 = vpack.c.b16 %v136, %v135
    %v146 = vpack.c.b16 %v138, %v137
    %155 = vmatprep.subr.bf16.mxu0 0
    %156 = vmatpush1.bf16.msra.mxu0 %v139
    %157 = vmatprep.subr.bf16.mxu0 0
    %158 = vmatpush1.bf16.msra.mxu0 %v140
    %159 = vmatprep.subr.bf16.mxu0 0
    %160 = vmatpush1.bf16.msra.mxu0 %v141
    %161 = vmatprep.subr.bf16.mxu0 0
    %162 = vmatpush1.bf16.msra.mxu0 %v142
    %163 = vmatprep.subr.bf16.mxu0 0
    %164 = vmatpush1.bf16.msra.mxu0 %v143
    %165 = vmatprep.subr.bf16.mxu0 0
    %166 = vmatpush1.bf16.msra.mxu0 %v144
    %167 = vmatprep.subr.bf16.mxu0 0
    %168 = vmatpush1.bf16.msra.mxu0 %v145
    %169 = vmatprep.subr.bf16.mxu0 0
    %170 = vmatpush1.bf16.msra.mxu0 %v146
    %171 = vmatprep.subr.bf16.mxu0 0
    %172 = vmatpush1.bf16.msra.mxu0 0
    %173 = vmatprep.subr.bf16.mxu0 0
    %174 = vmatpush1.bf16.msra.mxu0 0
    %175 = vmatprep.subr.bf16.mxu0 0
    %176 = vmatpush1.bf16.msra.mxu0 0
    %177 = vmatprep.subr.bf16.mxu0 0
    %178 = vmatpush1.bf16.msra.mxu0 0
    %179 = vmatprep.subr.bf16.mxu0 0
    %180 = vmatpush1.bf16.msra.mxu0 0
    %181 = vmatprep.subr.bf16.mxu0 0
    %182 = vmatpush1.bf16.msra.mxu0 0
    %183 = vmatprep.subr.bf16.mxu0 0
    %184 = vmatpush1.bf16.msra.mxu0 0
    %185 = vmatprep.subr.bf16.mxu0 0
    %186 = vmatpush1.bf16.msra.mxu0 0
    %187 = vmatprep.mubr.bf16.mxu0 0
    %188 = vmatmul.mubr.bf16.gmra.mrb[0].mxu0 %v90
    %v189 = vpop.f32.mrb[0].mxu0
    %v190 = vadd.f32 0.0, %v189
    %v191 = vpop.f32.mrb[0].mxu0
    %v192 = vpop.f32.mrb[0].mxu0
    %v193 = vpop.f32.mrb[0].mxu0
    %194 = vdwg.mxu0
    %v195 = vpack.c.bf16 %v190, %v190
    %v196 = vld [vmem:[%s2] sm:$0xf]
    %v197 = vld [vmem:[%s2 + $0x4] sm:$0xf]
    %v198 = vld [vmem:[%s2 + $0x8] sm:$0xf]
    %v199 = vld [vmem:[%s2 + $0xc] sm:$0xf]
    %v200 = vld [vmem:[%s3] sm:$0x1]
    %v202 = vlaneseq
    %v203 = vshrl.u32 %v202, 7
    %v204 = vsub.s32 0, %v203
    %v205 = vrot.slane %v200, %v204
    %v211 = vunpack.c.l.b16 %v196
    %v212 = vunpack.c.l.b16 %v197
    %v213 = vunpack.c.l.b16 %v198
    %v214 = vunpack.c.l.b16 %v199
    %v215 = vpack.c.b16 %v212, %v211
    %v216 = vpack.c.b16 %v214, %v213
    %vm219 = vcmask 261120
    %v221 = vsel %vm219, %v195, 0
    %223 = vmatprep.subr.bf16.mxu0 0
    %224 = vmatpush1.bf16.msra.mxu0 %v215
    %225 = vmatprep.subr.bf16.mxu0 0
    %226 = vmatpush1.bf16.msra.mxu0 %v216
    %227 = vmatprep.subr.bf16.mxu0 0
    %228 = vmatpush1.bf16.msra.mxu0 0
    %229 = vmatprep.subr.bf16.mxu0 0
    %230 = vmatpush1.bf16.msra.mxu0 0
    %231 = vmatprep.subr.bf16.mxu0 0
    %232 = vmatpush1.bf16.msra.mxu0 0
    %233 = vmatprep.subr.bf16.mxu0 0
    %234 = vmatpush1.bf16.msra.mxu0 0
    %235 = vmatprep.subr.bf16.mxu0 0
    %236 = vmatpush1.bf16.msra.mxu0 0
    %237 = vmatprep.subr.bf16.mxu0 0
    %238 = vmatpush1.bf16.msra.mxu0 0
    %239 = vmatprep.subr.bf16.mxu0 0
    %240 = vmatpush1.bf16.msra.mxu0 0
    %241 = vmatprep.subr.bf16.mxu0 0
    %242 = vmatpush1.bf16.msra.mxu0 0
    %243 = vmatprep.subr.bf16.mxu0 0
    %244 = vmatpush1.bf16.msra.mxu0 0
    %245 = vmatprep.subr.bf16.mxu0 0
    %246 = vmatpush1.bf16.msra.mxu0 0
    %247 = vmatprep.subr.bf16.mxu0 0
    %248 = vmatpush1.bf16.msra.mxu0 0
    %249 = vmatprep.subr.bf16.mxu0 0
    %250 = vmatpush1.bf16.msra.mxu0 0
    %251 = vmatprep.subr.bf16.mxu0 0
    %252 = vmatpush1.bf16.msra.mxu0 0
    %253 = vmatprep.subr.bf16.mxu0 0
    %254 = vmatpush1.bf16.msra.mxu0 0
    %255 = vmatprep.mubr.bf16.mxu0 0
    %256 = vmatmul.mubr.bf16.gmra.mrb[0].mxu0 %v221
    %v257 = vpop.f32.mrb[0].mxu0
    %v258 = vadd.f32 %v205, %v257
    %v259 = vpop.f32.mrb[0].mxu0
    %v260 = vpop.f32.mrb[0].mxu0
    %v261 = vpop.f32.mrb[0].mxu0
    %262 = vdwg.mxu0
    %v263 = vmax.f32 %v258, 0.0
    %v264 = vpack.c.bf16 %v263, %v263
    %v265 = vld [vmem:[%s4] sm:$0xf]
    %v266 = vld [vmem:[%s4 + $0x4] sm:$0xf]
    %v267 = vld [vmem:[%s4 + $0x8] sm:$0xf]
    %v268 = vld [vmem:[%s4 + $0xc] sm:$0xf]
    %v269 = vld [vmem:[%s5] sm:$0x1]
    %v271 = vlaneseq
    %v272 = vshrl.u32 %v271, 7
    %v273 = vsub.s32 0, %v272
    %v274 = vrot.slane %v269, %v273
    %v280 = vunpack.c.l.b16 %v265
    %v281 = vunpack.c.l.b16 %v266
    %v282 = vunpack.c.l.b16 %v267
    %v283 = vunpack.c.l.b16 %v268
    %v284 = vpack.c.b16 %v281, %v280
    %v285 = vpack.c.b16 %v283, %v282
    %v289 = vsel %vm219, %v264, 0
    %291 = vmatprep.subr.bf16.mxu0 0
    %292 = vmatpush1.bf16.msra.mxu0 %v284
    %293 = vmatprep.subr.bf16.mxu0 0
    %294 = vmatpush1.bf16.msra.mxu0 %v285
    %295 = vmatprep.subr.bf16.mxu0 0
    %296 = vmatpush1.bf16.msra.mxu0 0
    %297 = vmatprep.subr.bf16.mxu0 0
    %298 = vmatpush1.bf16.msra.mxu0 0
    %299 = vmatprep.subr.bf16.mxu0 0
    %300 = vmatpush1.bf16.msra.mxu0 0
    %301 = vmatprep.subr.bf16.mxu0 0
    %302 = vmatpush1.bf16.msra.mxu0 0
    %303 = vmatprep.subr.bf16.mxu0 0
    %304 = vmatpush1.bf16.msra.mxu0 0
    %305 = vmatprep.subr.bf16.mxu0 0
    %306 = vmatpush1.bf16.msra.mxu0 0
    %307 = vmatprep.subr.bf16.mxu0 0
    %308 = vmatpush1.bf16.msra.mxu0 0
    %309 = vmatprep.subr.bf16.mxu0 0
    %310 = vmatpush1.bf16.msra.mxu0 0
    %311 = vmatprep.subr.bf16.mxu0 0
    %312 = vmatpush1.bf16.msra.mxu0 0
    %313 = vmatprep.subr.bf16.mxu0 0
    %314 = vmatpush1.bf16.msra.mxu0 0
    %315 = vmatprep.subr.bf16.mxu0 0
    %316 = vmatpush1.bf16.msra.mxu0 0
    %317 = vmatprep.subr.bf16.mxu0 0
    %318 = vmatpush1.bf16.msra.mxu0 0
    %319 = vmatprep.subr.bf16.mxu0 0
    %320 = vmatpush1.bf16.msra.mxu0 0
    %321 = vmatprep.subr.bf16.mxu0 0
    %322 = vmatpush1.bf16.msra.mxu0 0
    %323 = vmatprep.mubr.bf16.mxu0 0
    %324 = vmatmul.mubr.bf16.gmra.mrb[0].mxu0 %v289
    %v325 = vpop.f32.mrb[0].mxu0
    %v326 = vadd.f32 %v274, %v325
    %v327 = vpop.f32.mrb[0].mxu0
    %v328 = vpop.f32.mrb[0].mxu0
    %v329 = vpop.f32.mrb[0].mxu0
    %330 = vdwg.mxu0
    %v331 = vmax.f32 %v326, 0.0
    %v332 = vpack.c.bf16 %v331, %v331
    %v333 = vld [vmem:[%s6] sm:$0xf]
    %v334 = vld [vmem:[%s6 + $0x4] sm:$0xf]
    %v335 = vld [vmem:[%s6 + $0x8] sm:$0xf]
    %v336 = vld [vmem:[%s6 + $0xc] sm:$0xf]
    %v337 = vld [vmem:[%s7] sm:$0x1]
    %v339 = vlaneseq
    %v340 = vshrl.u32 %v339, 7
    %v341 = vsub.s32 0, %v340
    %v342 = vrot.slane %v337, %v341
    %v348 = vunpack.c.l.b16 %v333
    %v349 = vunpack.c.l.b16 %v334
    %v350 = vunpack.c.l.b16 %v335
    %v351 = vunpack.c.l.b16 %v336
    %v352 = vpack.c.b16 %v349, %v348
    %v353 = vpack.c.b16 %v351, %v350
    %v357 = vsel %vm219, %v332, 0
    %359 = vmatprep.subr.bf16.mxu0 0
    %360 = vmatpush1.bf16.msra.mxu0 %v352
    %361 = vmatprep.subr.bf16.mxu0 0
    %362 = vmatpush1.bf16.msra.mxu0 %v353
    %363 = vmatprep.subr.bf16.mxu0 0
    %364 = vmatpush1.bf16.msra.mxu0 0
    %365 = vmatprep.subr.bf16.mxu0 0
    %366 = vmatpush1.bf16.msra.mxu0 0
    %367 = vmatprep.subr.bf16.mxu0 0
    %368 = vmatpush1.bf16.msra.mxu0 0
    %369 = vmatprep.subr.bf16.mxu0 0
    %370 = vmatpush1.bf16.msra.mxu0 0
    %371 = vmatprep.subr.bf16.mxu0 0
    %372 = vmatpush1.bf16.msra.mxu0 0
    %373 = vmatprep.subr.bf16.mxu0 0
    %374 = vmatpush1.bf16.msra.mxu0 0
    %375 = vmatprep.subr.bf16.mxu0 0
    %376 = vmatpush1.bf16.msra.mxu0 0
    %377 = vmatprep.subr.bf16.mxu0 0
    %378 = vmatpush1.bf16.msra.mxu0 0
    %379 = vmatprep.subr.bf16.mxu0 0
    %380 = vmatpush1.bf16.msra.mxu0 0
    %381 = vmatprep.subr.bf16.mxu0 0
    %382 = vmatpush1.bf16.msra.mxu0 0
    %383 = vmatprep.subr.bf16.mxu0 0
    %384 = vmatpush1.bf16.msra.mxu0 0
    %385 = vmatprep.subr.bf16.mxu0 0
    %386 = vmatpush1.bf16.msra.mxu0 0
    %387 = vmatprep.subr.bf16.mxu0 0
    %388 = vmatpush1.bf16.msra.mxu0 0
    %389 = vmatprep.subr.bf16.mxu0 0
    %390 = vmatpush1.bf16.msra.mxu0 0
    %391 = vmatprep.mubr.bf16.mxu0 0
    %392 = vmatmul.mubr.bf16.gmra.mrb[0].mxu0 %v357
    %v393 = vpop.f32.mrb[0].mxu0
    %v394 = vadd.f32 %v342, %v393
    %v395 = vpop.f32.mrb[0].mxu0
    %v396 = vpop.f32.mrb[0].mxu0
    %v397 = vpop.f32.mrb[0].mxu0
    %398 = vdwg.mxu0
    %399 = vst [vmem:[#allocation2] sm:$0xff] %v394
    // Predicated region
    $region34: #{tpu_custom_call.1} parent=1 // pred_check
      _
    $region35: #{tpu_custom_call.1} parent=1 // pred_check_branch
      %401 = sbr.rel (0) target = $region37
    $region36: #{tpu_custom_call.1} parent=1 // pred_region
      %s403 = ssub.s32 128, 128
      %404 = vsyncadd [#allocation3], %s403
      %s406 = sshll.u32 [#allocation2], 4
      %s407 = int_to_ptr.vmem [resolvable:$true] %s406
      %409 = dma.vmem_to_hbm [thread:$0]  %s407, 128, %s8, [#allocation3]
    $region37: #{tpu_custom_call.1} parent=1 // pred_fallthru
      _
    // Predicated region
    $region38: #{tpu_custom_call.1} parent=1 // pred_check
      _
    $region39: #{tpu_custom_call.1} parent=1 // pred_check_branch
      %411 = sbr.rel (0) target = $region41
    $region40: #{tpu_custom_call.1} parent=1 // pred_region
      %412 = dma.done [#allocation3], 128
    $region41: #{tpu_custom_call.1} parent=1 // pred_fallthru
      _
    %413 = vsyncpa [#allocation3], 1

</llo_original>
